<compile_context>
chip_gen: v6e
topology: v6e:2x2x1
jax: 0.10.0
libtpu: 0.0.40
codegen_flags: <defaults>
</compile_context>

<pallas_src>
import jax
import jax.numpy as jnp
from jax import lax
from jax.experimental import pallas as pl
from jax.experimental.pallas import tpu as pltpu


def _self_attn_kernel(lens_ref, inp_ref, w_ref, out_ref):
    """One grid step == TB batch elements.

    lens_ref : VMEM int32 (TB, 1, 1) -- valid lengths for this batch tile
    inp_ref  : VMEM       (TB, S, D) -- input sequences
    w_ref    : VMEM f32   (1, 1, D)  -- scorer weight (nn.Linear(d_hid, 1).weight)
    out_ref  : VMEM       (TB, 1, D) -- pooled context
    """
    x = inp_ref[...].astype(jnp.float32)                       # (TB, S, D)
    tb, s_len, d = x.shape

    # scores = <x, w> contracting D, batched over TB:
    # (TB, 1, D) x (TB, S, D) -> (TB, 1, S)                    [MXU]
    w = jnp.broadcast_to(w_ref[...], (tb, 1, d))               # (TB, 1, D)
    scores = jnp.einsum("bqd,bkd->bqk", w, x,
                        preferred_element_type=jnp.float32)    # (TB, 1, S)
    # NOTE: scorer bias omitted on purpose -- softmax is shift-invariant.

    # mask positions >= lens[b]   (matches scores.data[i, l:] = -inf)
    pos = lax.broadcasted_iota(jnp.int32, (tb, 1, s_len), 2)   # (TB, 1, S)
    scores = jnp.where(pos < lens_ref[...], scores, -jnp.inf)

    # softmax over the sequence (lane) axis
    m = jnp.max(scores, axis=-1, keepdims=True)                # (TB, 1, 1)
    e = jnp.exp(scores - m)                                    # exp(-inf) = 0
    denom = jnp.sum(e, axis=-1, keepdims=True)                 # (TB, 1, 1)
    probs = e * pl.reciprocal(denom, approx=False)             # (TB, 1, S)

    # context = probs @ x contracting S:
    # (TB, 1, S) x (TB, S, D) -> (TB, 1, D)                    [MXU]
    ctx = jnp.einsum("bqk,bkd->bqd", probs, x,
                     preferred_element_type=jnp.float32)
    out_ref[...] = ctx.astype(out_ref.dtype)


def self_attention(inp, lens, weight, bias, *, block_b=8):
    """inp: (B, S, D), lens: (B,) int, weight: (1, D), bias: (1,) -> (B, D).

    `bias` is accepted for API parity with the PyTorch module but is not used:
    adding a constant to every score is a no-op under softmax.
    """
    del bias
    B, S, D = inp.shape
    itemsize = jnp.dtype(inp.dtype).itemsize

    # Per-generation VMEM sizing: v5e/v6e have 128 MiB physical, v7x only 64 MiB.
    try:
        vmem_cap = int(pltpu.get_tpu_info().vmem_capacity_bytes)
    except Exception:
        vmem_cap = 64 * 1024 * 1024  # conservative fallback
    vmem_limit = min(vmem_cap * 3 // 4, 96 * 1024 * 1024)      # 48 MiB on v7x, 96 MiB on v5e/v6e
    # One input block; x2 for double buffering + f32 working copy + headroom.
    blk_budget = max(vmem_limit // 4, 1 << 20)

    tb = max(1, min(block_b, B, blk_budget // max(1, S * D * itemsize)))
    grid = (pl.cdiv(B, tb),)

    lens3d = lens.astype(jnp.int32).reshape(B, 1, 1)
    w3d = weight.astype(jnp.float32).reshape(1, 1, D)

    out = pl.pallas_call(
        _self_attn_kernel,
        out_shape=jax.ShapeDtypeStruct((B, 1, D), inp.dtype),
        grid=grid,
        in_specs=[
            pl.BlockSpec((tb, 1, 1), lambda b: (b, 0, 0)),     # lens
            pl.BlockSpec((tb, S, D), lambda b: (b, 0, 0)),     # inp
            pl.BlockSpec((1, 1, D), lambda b: (0, 0, 0)),      # scorer weight
        ],
        out_specs=pl.BlockSpec((tb, 1, D), lambda b: (b, 0, 0)),
        compiler_params=pltpu.CompilerParams(
            dimension_semantics=("parallel",),
            vmem_limit_bytes=int(vmem_limit),
        ),
    )(lens3d, inp, w3d)
    return out.reshape(B, D)


def self_attention_ref(inp, lens, weight, bias):
    """Pure-JAX reference mirroring the PyTorch forward (bias included)."""
    B, S, D = inp.shape
    scores = jnp.einsum("bsd,od->bs", inp, weight) + bias[0]   # (B, S)
    idx = jnp.arange(S)[None, :]
    scores = jnp.where(idx < lens[:, None], scores, -jnp.inf)
    probs = jax.nn.softmax(scores, axis=1)
    return jnp.einsum("bs,bsd->bd", probs, inp)


if __name__ == "__main__":
    key = jax.random.PRNGKey(0)

    def run_case(B, S, D, lens_list, block_b):
        k_inp, k_w, k_b = jax.random.split(jax.random.fold_in(key, B * 1000 + S), 3)
        inp = jax.random.normal(k_inp, (B, S, D), dtype=jnp.float32)
        lens = jnp.array(lens_list, dtype=jnp.int32)
        # nn.Linear(d_hid, 1) init: uniform(-1/sqrt(D), 1/sqrt(D))
        bound = 1.0 / (D ** 0.5)
        weight = jax.random.uniform(k_w, (1, D), jnp.float32, -bound, bound)
        bias = jax.random.uniform(k_b, (1,), jnp.float32, -bound, bound)

        out = jax.block_until_ready(
            self_attention(inp, lens, weight, bias, block_b=block_b))
        ref = self_attention_ref(inp, lens, weight, bias)
        assert out.shape == (B, D)
        assert jnp.allclose(out, ref, atol=1e-5, rtol=1e-5), "mismatch vs reference"

    # Small shapes consistent with the module (batch, seq_len, d_hid).
    run_case(B=8, S=8, D=32, lens_list=[8, 5, 1, 8, 3, 7, 2, 6], block_b=4)  # 2 grid steps
    run_case(B=2, S=8, D=32, lens_list=[8, 5], block_b=8)                    # TB clamped to B

    print("KERNEL_OK")
</pallas_src>

<mosaic_0001>
module attributes {stable_mosaic.version = 11 : i64} {
  func.func @_self_attn_kernel(%arg0: i32, %arg1: memref<4x1x1xi32, #tpu.memory_space<vmem>>, %arg2: memref<4x8x32xf32, #tpu.memory_space<vmem>>, %arg3: memref<1x1x32xf32, #tpu.memory_space<vmem>>, %arg4: memref<4x1x32xf32, #tpu.memory_space<vmem>>) attributes {dimension_semantics = [#tpu.dimension_semantics<parallel>], iteration_bounds = array<i64: 2>, scalar_prefetch = 0 : i64, scratch_operands = 0 : i64, tpu.core_type = #tpu.core_type<tc>, window_params = [{transform_indices = @transform_0, window_bounds = array<i64: 4, 1, 1>}, {transform_indices = @transform_1, window_bounds = array<i64: 4, 8, 32>}, {pipeline_mode = #tpu.pipeline_mode<synchronous>, transform_indices = @transform_2, window_bounds = array<i64: 1, 1, 32>}, {transform_indices = @transform_3, window_bounds = array<i64: 4, 1, 32>}]} {
    %c0 = arith.constant 0 : index
    %c0_0 = arith.constant 0 : index
    %c0_1 = arith.constant 0 : index
    %0 = vector.load %arg2[%c0, %c0_0, %c0_1] : memref<4x8x32xf32, #tpu.memory_space<vmem>>, vector<4x8x32xf32>
    %c0_2 = arith.constant 0 : index
    %c0_3 = arith.constant 0 : index
    %c0_4 = arith.constant 0 : index
    %1 = vector.load %arg3[%c0_2, %c0_3, %c0_4] : memref<1x1x32xf32, #tpu.memory_space<vmem>>, vector<1x1x32xf32>
    %2 = vector.shape_cast %1 : vector<1x1x32xf32> to vector<1x1x32xf32>
    %3 = vector.broadcast %2 : vector<1x1x32xf32> to vector<4x1x32xf32>
    "tpu.trace_start"() <{level = 10 : i32, message = "bqd,bkd->bqk"}> : () -> ()
    %cst = arith.constant dense<0.000000e+00> : vector<4x1x8xf32>
    %4 = tpu.matmul %3, %0, %cst {dimension_numbers = #tpu.dot_dimension_numbers<[2], [2], [1], [1], [0, 0, 0, 1, 1, 1], [0], [0]>} : vector<4x1x32xf32>, vector<4x8x32xf32>, vector<4x1x8xf32> -> vector<4x1x8xf32>
    "tpu.trace_stop"() : () -> ()
    %5 = tpu.iota {dimensions = array<i32: 2>} : vector<4x1x8xi32>
    %c0_5 = arith.constant 0 : index
    %c0_6 = arith.constant 0 : index
    %c0_7 = arith.constant 0 : index
    %6 = vector.load %arg1[%c0_5, %c0_6, %c0_7] : memref<4x1x1xi32, #tpu.memory_space<vmem>>, vector<4x1x1xi32>
    %7 = vector.broadcast %6 : vector<4x1x1xi32> to vector<4x1x8xi32>
    %8 = arith.cmpi slt, %5, %7 : vector<4x1x8xi32>
    %cst_8 = arith.constant 0xFF800000 : f32
    %9 = vector.broadcast %cst_8 : f32 to vector<4x1x8xf32>
    %10 = arith.select %8, %4, %9 : vector<4x1x8xi1>, vector<4x1x8xf32>
    %cst_9 = arith.constant dense<0xFF800000> : vector<4x1xf32>
    %11 = vector.multi_reduction <maximumf>, %10, %cst_9 [2] : vector<4x1x8xf32> to vector<4x1xf32>
    %12 = vector.shape_cast %11 : vector<4x1xf32> to vector<4x1x1xf32>
    %13 = vector.broadcast %12 : vector<4x1x1xf32> to vector<4x1x8xf32>
    %14 = arith.subf %10, %13 : vector<4x1x8xf32>
    %15 = math.exp %14 : vector<4x1x8xf32>
    %cst_10 = arith.constant dense<0.000000e+00> : vector<4x1xf32>
    %16 = vector.multi_reduction <add>, %15, %cst_10 [2] : vector<4x1x8xf32> to vector<4x1xf32>
    %17 = vector.shape_cast %16 : vector<4x1xf32> to vector<4x1x1xf32>
    %18 = tpu.reciprocal %17 : vector<4x1x1xf32> -> vector<4x1x1xf32>
    %19 = vector.broadcast %18 : vector<4x1x1xf32> to vector<4x1x8xf32>
    %20 = arith.mulf %15, %19 : vector<4x1x8xf32>
    "tpu.trace_start"() <{level = 10 : i32, message = "bqk,bkd->bqd"}> : () -> ()
    %cst_11 = arith.constant dense<0.000000e+00> : vector<4x1x32xf32>
    %21 = tpu.matmul %20, %0, %cst_11 {dimension_numbers = #tpu.dot_dimension_numbers<[2], [1], [1], [2], [0, 0, 0, 1, 1, 2], [0], [0]>} : vector<4x1x8xf32>, vector<4x8x32xf32>, vector<4x1x32xf32> -> vector<4x1x32xf32>
    "tpu.trace_stop"() : () -> ()
    %c0_12 = arith.constant 0 : index
    %c0_13 = arith.constant 0 : index
    %c0_14 = arith.constant 0 : index
    %22 = vector.load %arg4[%c0_12, %c0_13, %c0_14] : memref<4x1x32xf32, #tpu.memory_space<vmem>>, vector<4x1x32xf32>
    tpu.vector_store %arg4[%c0_12, %c0_13, %c0_14], %21 {strides = array<i32>} : memref<4x1x32xf32, #tpu.memory_space<vmem>>, vector<4x1x32xf32>,
    return
  }
  func.func @transform_0(%arg0: i32) -> (i32, i32, i32) {
    %c0_i32 = arith.constant 0 : i32
    %c0_i32_0 = arith.constant 0 : i32
    %c0_i32_1 = arith.constant 0 : i32
    return %arg0, %c0_i32, %c0_i32_0 : i32, i32, i32
  }
  func.func @transform_1(%arg0: i32) -> (i32, i32, i32) {
    %c0_i32 = arith.constant 0 : i32
    %c0_i32_0 = arith.constant 0 : i32
    %c0_i32_1 = arith.constant 0 : i32
    return %arg0, %c0_i32, %c0_i32_0 : i32, i32, i32
  }
  func.func @transform_2(%arg0: i32) -> (i32, i32, i32) {
    %c0_i32 = arith.constant 0 : i32
    %c0_i32_0 = arith.constant 0 : i32
    %c0_i32_1 = arith.constant 0 : i32
    %c0_i32_2 = arith.constant 0 : i32
    return %c0_i32, %c0_i32_0, %c0_i32_1 : i32, i32, i32
  }
  func.func @transform_3(%arg0: i32) -> (i32, i32, i32) {
    %c0_i32 = arith.constant 0 : i32
    %c0_i32_0 = arith.constant 0 : i32
    %c0_i32_1 = arith.constant 0 : i32
    return %arg0, %c0_i32, %c0_i32_0 : i32, i32, i32
  }
}

</mosaic_0001>

<llo_original>
// kernel: tpu_custom_call.1
$region0: #{tpu_custom_call.1}
  #allocation0 [shape = 'u32[]', space=smem, size = 0x4, offset = 0x4, fixed_abs, tag = 'smem constant byte address 0x4 - core index']
  #allocation1 [shape = 'u32[144,128]{1,0:T(1,128)}', space=vmem, size = 0x12000, scoped, tag = 'internal scratch']
  %s0 = inlined_call_operand.vmem [shape: s32[8,1,1], index: 0, kind: input, shape index: {}]
  %s1 = inlined_call_operand.hbm [shape: f32[8,8,32], index: 1, kind: input, shape index: {}]
  %s2 = inlined_call_operand.vmem [shape: f32[1,1,32], index: 2, kind: input, shape index: {}]
  %s3 = inlined_call_operand.hbm [shape: f32[8,1,32], index: 3, kind: output, shape index: {}]
  %s4 = sld [smem:[#allocation0]]
  $region49: #{tpu_custom_call.1} parent=0
    _
  %s6 = ssub.s32 1, %s4
  %s7 = scalar_select 0, %s6, %s4
  $region1: #{tpu_custom_call.1} parent=0
    #allocation2 [shape = 'u8[32768]{0}', space=vmem, size = 0x8000, scoped, tag = 'input window, operand 1']
    #allocation3 [shape = 's32[2]{0}', space=sflag, size = 0x8, scoped, tag = 'scoped memory for tpu_custom_call.1']
    #allocation4 [shape = 's32[2]{0}', space=sflag, size = 0x8, scoped, tag = 'scoped memory for tpu_custom_call.1']
    #allocation5 [shape = 'u8[4096]{0}', space=vmem, size = 0x1000, scoped, tag = 'output window, operand 0']
    %8 = vsyncpa [#allocation3], 0
    %s9 = scalar_lea.sflag [#allocation3], 1
    %10 = vsyncpa %s9, 0
    %11 = vsyncpa [#allocation4], 0
    %s12 = scalar_lea.sflag [#allocation4], 1
    %13 = vsyncpa %s12, 0
    loop: start=0, step=1, limit=4
    $region2: #{tpu_custom_call.1} parent=1 // loop_pre_header
      _
    $region3: #{tpu_custom_call.1} parent=1 // loop_header
      %s15 = sphi 0, %s19
      %p16 = scmp.ge.s32.totalorder %s15, 4
      %s25 = sphi 0, %s27
      %s28 = sphi 0, %s25
      %s29 = sphi 0, %s28
      %s45 = sphi 0, %s29
      %s51 = sphi 0, %s53
      %s54 = sphi 0, %s51
      %s55 = sphi 0, %s54
      %s71 = sphi 0, %s55
      %s75 = sphi 0, %s75
      %s77 = sphi 0, %s75
      %s78 = sphi 0, %s77
      %s92 = sphi 0, %s78
      %s98 = sphi 0, %s100
      %s101 = sphi 0, %s98
      %s102 = sphi 0, %s101
      %s118 = sphi 0, %s102
    $region4: #{tpu_custom_call.1} parent=1 // loop_header_branch
      %18 = sbr.rel (%p16) target = $region8
    $region5: #{tpu_custom_call.1} parent=1 // loop_body
      %s20 = ssub.s32 %s15, 1
      %s21 = ssub.s32 %s15, 2
      %s22 = sadd.s32 %s15, 1
      %s23 = ssub.s32 %s15, %s22
      %p24 = scmp.eq.s32.totalorder %s23, 0
      %s26 = sadd.s32 %s25, 1
      %s27 = scalar_select %p24, %s25, %s26
      %p30 = pneg %p24
      %p31 = scmp.eq.s32.totalorder %s15, 1
      %p32 = por %p30, %p31
      %p33 = scmp.ne.s32.totalorder %s25, %s28
      %p34 = scmp.eq.s32.totalorder %s15, 0
      %p35 = por %p33, %p34
      %p36 = scmp.ne.s32.totalorder %s25, %s28
      %p37 = scmp.eq.s32.totalorder %s20, 1
      %p38 = por %p36, %p37
      %p39 = scmp.ne.s32.totalorder %s28, %s29
      %p40 = scmp.eq.s32.totalorder %s20, 0
      %p41 = por %p39, %p40
      %p42 = scmp.ne.s32.totalorder %s28, %s29
      %p43 = scmp.eq.s32.totalorder %s21, 1
      %p44 = por %p42, %p43
      %p46 = scmp.ne.s32.totalorder %s29, %s45
      %p47 = scmp.eq.s32.totalorder %s21, 0
      %p48 = por %p46, %p47
      %s49 = ssub.s32 %s15, %s22
      %p50 = scmp.eq.s32.totalorder %s49, 0
      %s52 = sadd.s32 %s51, 1
      %s53 = scalar_select %p50, %s51, %s52
      %p56 = pneg %p50
      %p57 = scmp.eq.s32.totalorder %s15, 1
      %p58 = por %p56, %p57
      %p59 = scmp.ne.s32.totalorder %s51, %s54
      %p60 = scmp.eq.s32.totalorder %s15, 0
      %p61 = por %p59, %p60
      %p62 = scmp.ne.s32.totalorder %s51, %s54
      %p63 = scmp.eq.s32.totalorder %s20, 1
      %p64 = por %p62, %p63
      %p65 = scmp.ne.s32.totalorder %s54, %s55
      %p66 = scmp.eq.s32.totalorder %s20, 0
      %p67 = por %p65, %p66
      %p68 = scmp.ne.s32.totalorder %s54, %s55
      %p69 = scmp.eq.s32.totalorder %s21, 1
      %p70 = por %p68, %p69
      %p72 = scmp.ne.s32.totalorder %s55, %s71
      %p73 = scmp.eq.s32.totalorder %s21, 0
      %p74 = por %p72, %p73
      %s76 = sadd.s32 %s75, 1
      %p79 = scmp.eq.s32.totalorder %s15, 1
      %p80 = scmp.ne.s32.totalorder %s75, %s77
      %p81 = scmp.eq.s32.totalorder %s15, 0
      %p82 = por %p80, %p81
      %p83 = scmp.ne.s32.totalorder %s75, %s77
      %p84 = scmp.eq.s32.totalorder %s20, 1
      %p85 = por %p83, %p84
      %p86 = scmp.ne.s32.totalorder %s77, %s78
      %p87 = scmp.eq.s32.totalorder %s20, 0
      %p88 = por %p86, %p87
      %p89 = scmp.ne.s32.totalorder %s77, %s78
      %p90 = scmp.eq.s32.totalorder %s21, 1
      %p91 = por %p89, %p90
      %p93 = scmp.ne.s32.totalorder %s78, %s92
      %p94 = scmp.eq.s32.totalorder %s21, 0
      %p95 = por %p93, %p94
      %s96 = ssub.s32 %s15, %s22
      %p97 = scmp.eq.s32.totalorder %s96, 0
      %s99 = sadd.s32 %s98, 1
      %s100 = scalar_select %p97, %s98, %s99
      %p103 = pneg %p97
      %p104 = scmp.eq.s32.totalorder %s15, 1
      %p105 = por %p103, %p104
      %p106 = scmp.ne.s32.totalorder %s98, %s101
      %p107 = scmp.eq.s32.totalorder %s15, 0
      %p108 = por %p106, %p107
      %p109 = scmp.ne.s32.totalorder %s98, %s101
      %p110 = scmp.eq.s32.totalorder %s20, 1
      %p111 = por %p109, %p110
      %p112 = scmp.ne.s32.totalorder %s101, %s102
      %p113 = scmp.eq.s32.totalorder %s20, 0
      %p114 = por %p112, %p113
      %p115 = scmp.ne.s32.totalorder %s101, %s102
      %p116 = scmp.eq.s32.totalorder %s21, 1
      %p117 = por %p115, %p116
      %p119 = scmp.ne.s32.totalorder %s102, %s118
      %p120 = scmp.eq.s32.totalorder %s21, 0
      %p121 = por %p119, %p120
      %p122 = scmp.le.s32.totalorder 1, %s15
      %p123 = scmp.lt.s32.totalorder %s15, 3
      %p124 = pnand %p122, %p123
      %p125 = pneg %p124
      // Predicated region
      $region9: #{tpu_custom_call.1} parent=5 // pred_check
        _
      $region10: #{tpu_custom_call.1} parent=5 // pred_check_branch
        %127 = sbr.rel (%p124) target = $region12
      $region11: #{tpu_custom_call.1} parent=5 // pred_region
        %s128 = ssub.s32 %s15, 1
        // Predicated region
        $region13: #{tpu_custom_call.1} parent=11 // pred_check
          %p129 = pneg %p88
        $region14: #{tpu_custom_call.1} parent=11 // pred_check_branch
          %131 = sbr.rel (%p129) target = $region16
        $region15: #{tpu_custom_call.1} parent=11 // pred_region
          _
        $region16: #{tpu_custom_call.1} parent=11 // pred_fallthru
          _
      $region12: #{tpu_custom_call.1} parent=5 // pred_fallthru
        _
      %p132 = scmp.lt.s32.totalorder %s15, 2
      // Predicated region
      $region17: #{tpu_custom_call.1} parent=5 // pred_check
        %p133 = pneg %p132
      $region18: #{tpu_custom_call.1} parent=5 // pred_check_branch
        %135 = sbr.rel (%p133) target = $region20
      $region19: #{tpu_custom_call.1} parent=5 // pred_region
        // Predicated region
        $region21: #{tpu_custom_call.1} parent=19 // pred_check
          %p136 = pneg %p35
        $region22: #{tpu_custom_call.1} parent=19 // pred_check_branch
          %138 = sbr.rel (%p136) target = $region24
        $region23: #{tpu_custom_call.1} parent=19 // pred_region
          %s139 = smul.u32 4, %s15
          %p140 = scmp.lt.s32.totalorder %s139, 7
          %s141 = scalar_select %p140, %s139, 7
          %s142 = scalar_lea.vmem %s0, %s141
          %s143 = smul.u32 4, %s15
        $region24: #{tpu_custom_call.1} parent=19 // pred_fallthru
          _
        // Predicated region
        $region25: #{tpu_custom_call.1} parent=19 // pred_check
          %p144 = pneg %p61
        $region26: #{tpu_custom_call.1} parent=19 // pred_check_branch
          %146 = sbr.rel (%p144) target = $region28
        $region27: #{tpu_custom_call.1} parent=19 // pred_region
          %s147 = sand.u32 %s51, 1
          %s148 = scalar_lea.sflag [#allocation3], %s147
          %s149 = sand.u32 %s51, 1
          %s150 = smul.addr %s149, 32
          %s151 = scalar_lea.vmem [#allocation2], %s150
          %s152 = smul.u32 4, %s15
          %s154 = ssub.s32 512, 512
          %155 = vsyncadd %s148, %s154
          %s156 = smul.addr %s152, 128
          %s157 = scalar_lea.hbm %s1, %s156
          %s158 = sshll.u32 %s151, 4
          %s159 = int_to_ptr.vmem [resolvable:$true] %s158
          %164 = dma.hbm_to_vmem [thread:$0]  %s157, 512, %s159, %s148, 128, 128, 8
        $region28: #{tpu_custom_call.1} parent=19 // pred_fallthru
          _
      $region20: #{tpu_custom_call.1} parent=5 // pred_fallthru
        _
      %p165 = scmp.le.s32.totalorder 1, %s15
      %p166 = scmp.lt.s32.totalorder %s15, 3
      %p167 = pnand %p165, %p166
      %p168 = pneg %p167
      // Predicated region
      $region29: #{tpu_custom_call.1} parent=5 // pred_check
        _
      $region30: #{tpu_custom_call.1} parent=5 // pred_check_branch
        %170 = sbr.rel (%p167) target = $region32
      $region31: #{tpu_custom_call.1} parent=5 // pred_region
        %s171 = ssub.s32 %s15, 1
        %s172 = sand.u32 %s54, 1
        %s173 = scalar_lea.sflag [#allocation3], %s172
        %s174 = sand.u32 %s54, 1
        %s175 = smul.addr %s174, 32
        %s176 = scalar_lea.vmem [#allocation2], %s175
        // Predicated region
        $region33: #{tpu_custom_call.1} parent=31 // pred_check
          %p177 = pneg %p67
        $region34: #{tpu_custom_call.1} parent=31 // pred_check_branch
          %179 = sbr.rel (%p177) target = $region36
        $region35: #{tpu_custom_call.1} parent=31 // pred_region
          %180 = dma.done %s173, 512
        $region36: #{tpu_custom_call.1} parent=31 // pred_fallthru
          _
        %s181 = smul.u32 4, %s20
        %p182 = scmp.lt.s32.totalorder %s181, 7
        %s183 = scalar_select %p182, %s181, 7
        %s184 = scalar_lea.vmem %s0, %s183
        %p185 = pneg %p41
        %p186 = pneg %p38
        %s187 = sand.u32 %s54, 1
        %s188 = scalar_lea.sflag [#allocation3], %s187
        %s189 = sand.u32 %s54, 1
        %s190 = smul.addr %s189, 32
        %s191 = scalar_lea.vmem [#allocation2], %s190
        %p192 = pneg %p67
        %p193 = pneg %p64
        %p194 = pneg %p88
        %p195 = pneg %p85
        %p196 = pneg %p114
        %p197 = pneg %p111
        %s198 = sand.u32 %s101, 1
        %s199 = scalar_lea.sflag [#allocation4], %s198
        %s200 = sand.u32 %s101, 1
        %s201 = smul.addr %s200, 4
        %s202 = scalar_lea.vmem [#allocation5], %s201
        %s203 = smul.u32 4, %s20
        %p204 = scmp.lt.s32.totalorder %s203, 7
        %s205 = scalar_select %p204, %s203, 7
        %s206 = scalar_lea.vmem %s0, %s205
        %s207 = smul.u32 4, %s20
        %s208 = smul.u32 4, %s20
        %s209 = smul.u32 4, %s20
        %v210 = vld [vmem:[%s176] sm:$0xff]
        %v211 = vld [vmem:[%s176 + $0x8] sm:$0xff]
        %v212 = vld [vmem:[%s176 + $0x10] sm:$0xff]
        %v213 = vld [vmem:[%s176 + $0x18] sm:$0xff]
        %v214 = vld [vmem:[%s2] sm:$0x1]
        %vm215 = vcmask 261120
        %v217 = vsel %vm215, %v214, 0
        %v220 = vsel %vm215, %v210, 0
        %222 = vmatprep.subr.mxu0 0.0
        %223 = vmatpush1.xpose.msra.mxu0 0.0
        %224 = vmatprep.subr.mxu0 0.0
        %225 = vmatpush1.xpose.msra.mxu0 0.0
        %226 = vmatprep.subr.mxu0 0.0
        %227 = vmatpush1.xpose.msra.mxu0 0.0
        %228 = vmatprep.subr.mxu0 0.0
        %229 = vmatpush1.xpose.msra.mxu0 0.0
        %230 = vmatprep.subr.mxu0 0.0
        %231 = vmatpush1.xpose.msra.mxu0 0.0
        %232 = vmatprep.subr.mxu0 0.0
        %233 = vmatpush1.xpose.msra.mxu0 0.0
        %234 = vmatprep.subr.mxu0 0.0
        %235 = vmatpush1.xpose.msra.mxu0 0.0
        %236 = vmatprep.subr.mxu0 0.0
        %237 = vmatpush1.xpose.msra.mxu0 0.0
        %238 = vmatprep.subr.mxu0 0.0
        %239 = vmatpush1.xpose.msra.mxu0 0.0
        %240 = vmatprep.subr.mxu0 0.0
        %241 = vmatpush1.xpose.msra.mxu0 0.0
        %242 = vmatprep.subr.mxu0 0.0
        %243 = vmatpush1.xpose.msra.mxu0 0.0
        %244 = vmatprep.subr.mxu0 0.0
        %245 = vmatpush1.xpose.msra.mxu0 0.0
        %246 = vmatprep.subr.mxu0 0.0
        %247 = vmatpush1.xpose.msra.mxu0 0.0
        %248 = vmatprep.subr.mxu0 0.0
        %249 = vmatpush1.xpose.msra.mxu0 0.0
        %250 = vmatprep.subr.mxu0 0.0
        %251 = vmatpush1.xpose.msra.mxu0 0.0
        %252 = vmatprep.subr.mxu0 0.0
        %253 = vmatpush1.xpose.msra.mxu0 %v220
        %254 = vmatprep.subr.mxu0 0.0
        %255 = vmatpush2.xpose.msra.mxu0 0.0
        %256 = vmatprep.subr.mxu0 0.0
        %257 = vmatpush2.xpose.msra.mxu0 0.0
        %258 = vmatprep.subr.mxu0 0.0
        %259 = vmatpush2.xpose.msra.mxu0 0.0
        %260 = vmatprep.subr.mxu0 0.0
        %261 = vmatpush2.xpose.msra.mxu0 0.0
        %262 = vmatprep.subr.mxu0 0.0
        %263 = vmatpush2.xpose.msra.mxu0 0.0
        %264 = vmatprep.subr.mxu0 0.0
        %265 = vmatpush2.xpose.msra.mxu0 0.0
        %266 = vmatprep.subr.mxu0 0.0
        %267 = vmatpush2.xpose.msra.mxu0 0.0
        %268 = vmatprep.subr.mxu0 0.0
        %269 = vmatpush2.xpose.msra.mxu0 0.0
        %270 = vmatprep.subr.mxu0 0.0
        %271 = vmatpush2.xpose.msra.mxu0 0.0
        %272 = vmatprep.subr.mxu0 0.0
        %273 = vmatpush2.xpose.msra.mxu0 0.0
        %274 = vmatprep.subr.mxu0 0.0
        %275 = vmatpush2.xpose.msra.mxu0 0.0
        %276 = vmatprep.subr.mxu0 0.0
        %277 = vmatpush2.xpose.msra.mxu0 0.0
        %278 = vmatprep.subr.mxu0 0.0
        %279 = vmatpush2.xpose.msra.mxu0 0.0
        %280 = vmatprep.subr.mxu0 0.0
        %281 = vmatpush2.xpose.msra.mxu0 0.0
        %282 = vmatprep.subr.mxu0 0.0
        %283 = vmatpush2.xpose.msra.mxu0 0.0
        %284 = vmatprep.subr.mxu0 0.0
        %285 = vmatpush2.xpose.msra.mxu0 0.0
        %286 = vmatprep.mubr.f32.mxu0 0.0
        %287 = vmatmul.mubr.f32.gmra.mxu0 %v217
        %v288 = vpop.f32.mrf.mxu0
        %v289 = vadd.f32 0.0, %v288
        %v290 = vpop.f32.mrf.mxu0
        %291 = vdwg.mxu0
        %v293 = vsel %vm215, %v211, 0
        %295 = vmatprep.subr.mxu0 0.0
        %296 = vmatpush1.xpose.msra.mxu0 0.0
        %297 = vmatprep.subr.mxu0 0.0
        %298 = vmatpush1.xpose.msra.mxu0 0.0
        %299 = vmatprep.subr.mxu0 0.0
        %300 = vmatpush1.xpose.msra.mxu0 0.0
        %301 = vmatprep.subr.mxu0 0.0
        %302 = vmatpush1.xpose.msra.mxu0 0.0
        %303 = vmatprep.subr.mxu0 0.0
        %304 = vmatpush1.xpose.msra.mxu0 0.0
        %305 = vmatprep.subr.mxu0 0.0
        %306 = vmatpush1.xpose.msra.mxu0 0.0
        %307 = vmatprep.subr.mxu0 0.0
        %308 = vmatpush1.xpose.msra.mxu0 0.0
        %309 = vmatprep.subr.mxu0 0.0
        %310 = vmatpush1.xpose.msra.mxu0 0.0
        %311 = vmatprep.subr.mxu0 0.0
        %312 = vmatpush1.xpose.msra.mxu0 0.0
        %313 = vmatprep.subr.mxu0 0.0
        %314 = vmatpush1.xpose.msra.mxu0 0.0
        %315 = vmatprep.subr.mxu0 0.0
        %316 = vmatpush1.xpose.msra.mxu0 0.0
        %317 = vmatprep.subr.mxu0 0.0
        %318 = vmatpush1.xpose.msra.mxu0 0.0
        %319 = vmatprep.subr.mxu0 0.0
        %320 = vmatpush1.xpose.msra.mxu0 0.0
        %321 = vmatprep.subr.mxu0 0.0
        %322 = vmatpush1.xpose.msra.mxu0 0.0
        %323 = vmatprep.subr.mxu0 0.0
        %324 = vmatpush1.xpose.msra.mxu0 0.0
        %325 = vmatprep.subr.mxu0 0.0
        %326 = vmatpush1.xpose.msra.mxu0 %v293
        %327 = vmatprep.subr.mxu0 0.0
        %328 = vmatpush2.xpose.msra.mxu0 0.0
        %329 = vmatprep.subr.mxu0 0.0
        %330 = vmatpush2.xpose.msra.mxu0 0.0
        %331 = vmatprep.subr.mxu0 0.0
        %332 = vmatpush2.xpose.msra.mxu0 0.0
        %333 = vmatprep.subr.mxu0 0.0
        %334 = vmatpush2.xpose.msra.mxu0 0.0
        %335 = vmatprep.subr.mxu0 0.0
        %336 = vmatpush2.xpose.msra.mxu0 0.0
        %337 = vmatprep.subr.mxu0 0.0
        %338 = vmatpush2.xpose.msra.mxu0 0.0
        %339 = vmatprep.subr.mxu0 0.0
        %340 = vmatpush2.xpose.msra.mxu0 0.0
        %341 = vmatprep.subr.mxu0 0.0
        %342 = vmatpush2.xpose.msra.mxu0 0.0
        %343 = vmatprep.subr.mxu0 0.0
        %344 = vmatpush2.xpose.msra.mxu0 0.0
        %345 = vmatprep.subr.mxu0 0.0
        %346 = vmatpush2.xpose.msra.mxu0 0.0
        %347 = vmatprep.subr.mxu0 0.0
        %348 = vmatpush2.xpose.msra.mxu0 0.0
        %349 = vmatprep.subr.mxu0 0.0
        %350 = vmatpush2.xpose.msra.mxu0 0.0
        %351 = vmatprep.subr.mxu0 0.0
        %352 = vmatpush2.xpose.msra.mxu0 0.0
        %353 = vmatprep.subr.mxu0 0.0
        %354 = vmatpush2.xpose.msra.mxu0 0.0
        %355 = vmatprep.subr.mxu0 0.0
        %356 = vmatpush2.xpose.msra.mxu0 0.0
        %357 = vmatprep.subr.mxu0 0.0
        %358 = vmatpush2.xpose.msra.mxu0 0.0
        %359 = vmatprep.mubr.f32.mxu0 0.0
        %360 = vmatmul.mubr.f32.gmra.mxu0 %v217
        %v361 = vpop.f32.mrf.mxu0
        %v362 = vadd.f32 0.0, %v361
        %v363 = vpop.f32.mrf.mxu0
        %364 = vdwg.mxu0
        %v366 = vsel %vm215, %v212, 0
        %368 = vmatprep.subr.mxu0 0.0
        %369 = vmatpush1.xpose.msra.mxu0 0.0
        %370 = vmatprep.subr.mxu0 0.0
        %371 = vmatpush1.xpose.msra.mxu0 0.0
        %372 = vmatprep.subr.mxu0 0.0
        %373 = vmatpush1.xpose.msra.mxu0 0.0
        %374 = vmatprep.subr.mxu0 0.0
        %375 = vmatpush1.xpose.msra.mxu0 0.0
        %376 = vmatprep.subr.mxu0 0.0
        %377 = vmatpush1.xpose.msra.mxu0 0.0
        %378 = vmatprep.subr.mxu0 0.0
        %379 = vmatpush1.xpose.msra.mxu0 0.0
        %380 = vmatprep.subr.mxu0 0.0
        %381 = vmatpush1.xpose.msra.mxu0 0.0
        %382 = vmatprep.subr.mxu0 0.0
        %383 = vmatpush1.xpose.msra.mxu0 0.0
        %384 = vmatprep.subr.mxu0 0.0
        %385 = vmatpush1.xpose.msra.mxu0 0.0
        %386 = vmatprep.subr.mxu0 0.0
        %387 = vmatpush1.xpose.msra.mxu0 0.0
        %388 = vmatprep.subr.mxu0 0.0
        %389 = vmatpush1.xpose.msra.mxu0 0.0
        %390 = vmatprep.subr.mxu0 0.0
        %391 = vmatpush1.xpose.msra.mxu0 0.0
        %392 = vmatprep.subr.mxu0 0.0
        %393 = vmatpush1.xpose.msra.mxu0 0.0
        %394 = vmatprep.subr.mxu0 0.0
        %395 = vmatpush1.xpose.msra.mxu0 0.0
        %396 = vmatprep.subr.mxu0 0.0
        %397 = vmatpush1.xpose.msra.mxu0 0.0
        %398 = vmatprep.subr.mxu0 0.0
        %399 = vmatpush1.xpose.msra.mxu0 %v366
        %400 = vmatprep.subr.mxu0 0.0
        %401 = vmatpush2.xpose.msra.mxu0 0.0
        %402 = vmatprep.subr.mxu0 0.0
        %403 = vmatpush2.xpose.msra.mxu0 0.0
        %404 = vmatprep.subr.mxu0 0.0
        %405 = vmatpush2.xpose.msra.mxu0 0.0
        %406 = vmatprep.subr.mxu0 0.0
        %407 = vmatpush2.xpose.msra.mxu0 0.0
        %408 = vmatprep.subr.mxu0 0.0
        %409 = vmatpush2.xpose.msra.mxu0 0.0
        %410 = vmatprep.subr.mxu0 0.0
        %411 = vmatpush2.xpose.msra.mxu0 0.0
        %412 = vmatprep.subr.mxu0 0.0
        %413 = vmatpush2.xpose.msra.mxu0 0.0
        %414 = vmatprep.subr.mxu0 0.0
        %415 = vmatpush2.xpose.msra.mxu0 0.0
        %416 = vmatprep.subr.mxu0 0.0
        %417 = vmatpush2.xpose.msra.mxu0 0.0
        %418 = vmatprep.subr.mxu0 0.0
        %419 = vmatpush2.xpose.msra.mxu0 0.0
        %420 = vmatprep.subr.mxu0 0.0
        %421 = vmatpush2.xpose.msra.mxu0 0.0
        %422 = vmatprep.subr.mxu0 0.0
        %423 = vmatpush2.xpose.msra.mxu0 0.0
        %424 = vmatprep.subr.mxu0 0.0
        %425 = vmatpush2.xpose.msra.mxu0 0.0
        %426 = vmatprep.subr.mxu0 0.0
        %427 = vmatpush2.xpose.msra.mxu0 0.0
        %428 = vmatprep.subr.mxu0 0.0
        %429 = vmatpush2.xpose.msra.mxu0 0.0
        %430 = vmatprep.subr.mxu0 0.0
        %431 = vmatpush2.xpose.msra.mxu0 0.0
        %432 = vmatprep.mubr.f32.mxu0 0.0
        %433 = vmatmul.mubr.f32.gmra.mxu0 %v217
        %v434 = vpop.f32.mrf.mxu0
        %v435 = vadd.f32 0.0, %v434
        %v436 = vpop.f32.mrf.mxu0
        %437 = vdwg.mxu0
        %v439 = vsel %vm215, %v213, 0
        %441 = vmatprep.subr.mxu0 0.0
        %442 = vmatpush1.xpose.msra.mxu0 0.0
        %443 = vmatprep.subr.mxu0 0.0
        %444 = vmatpush1.xpose.msra.mxu0 0.0
        %445 = vmatprep.subr.mxu0 0.0
        %446 = vmatpush1.xpose.msra.mxu0 0.0
        %447 = vmatprep.subr.mxu0 0.0
        %448 = vmatpush1.xpose.msra.mxu0 0.0
        %449 = vmatprep.subr.mxu0 0.0
        %450 = vmatpush1.xpose.msra.mxu0 0.0
        %451 = vmatprep.subr.mxu0 0.0
        %452 = vmatpush1.xpose.msra.mxu0 0.0
        %453 = vmatprep.subr.mxu0 0.0
        %454 = vmatpush1.xpose.msra.mxu0 0.0
        %455 = vmatprep.subr.mxu0 0.0
        %456 = vmatpush1.xpose.msra.mxu0 0.0
        %457 = vmatprep.subr.mxu0 0.0
        %458 = vmatpush1.xpose.msra.mxu0 0.0
        %459 = vmatprep.subr.mxu0 0.0
        %460 = vmatpush1.xpose.msra.mxu0 0.0
        %461 = vmatprep.subr.mxu0 0.0
        %462 = vmatpush1.xpose.msra.mxu0 0.0
        %463 = vmatprep.subr.mxu0 0.0
        %464 = vmatpush1.xpose.msra.mxu0 0.0
        %465 = vmatprep.subr.mxu0 0.0
        %466 = vmatpush1.xpose.msra.mxu0 0.0
        %467 = vmatprep.subr.mxu0 0.0
        %468 = vmatpush1.xpose.msra.mxu0 0.0
        %469 = vmatprep.subr.mxu0 0.0
        %470 = vmatpush1.xpose.msra.mxu0 0.0
        %471 = vmatprep.subr.mxu0 0.0
        %472 = vmatpush1.xpose.msra.mxu0 %v439
        %473 = vmatprep.subr.mxu0 0.0
        %474 = vmatpush2.xpose.msra.mxu0 0.0
        %475 = vmatprep.subr.mxu0 0.0
        %476 = vmatpush2.xpose.msra.mxu0 0.0
        %477 = vmatprep.subr.mxu0 0.0
        %478 = vmatpush2.xpose.msra.mxu0 0.0
        %479 = vmatprep.subr.mxu0 0.0
        %480 = vmatpush2.xpose.msra.mxu0 0.0
        %481 = vmatprep.subr.mxu0 0.0
        %482 = vmatpush2.xpose.msra.mxu0 0.0
        %483 = vmatprep.subr.mxu0 0.0
        %484 = vmatpush2.xpose.msra.mxu0 0.0
        %485 = vmatprep.subr.mxu0 0.0
        %486 = vmatpush2.xpose.msra.mxu0 0.0
        %487 = vmatprep.subr.mxu0 0.0
        %488 = vmatpush2.xpose.msra.mxu0 0.0
        %489 = vmatprep.subr.mxu0 0.0
        %490 = vmatpush2.xpose.msra.mxu0 0.0
        %491 = vmatprep.subr.mxu0 0.0
        %492 = vmatpush2.xpose.msra.mxu0 0.0
        %493 = vmatprep.subr.mxu0 0.0
        %494 = vmatpush2.xpose.msra.mxu0 0.0
        %495 = vmatprep.subr.mxu0 0.0
        %496 = vmatpush2.xpose.msra.mxu0 0.0
        %497 = vmatprep.subr.mxu0 0.0
        %498 = vmatpush2.xpose.msra.mxu0 0.0
        %499 = vmatprep.subr.mxu0 0.0
        %500 = vmatpush2.xpose.msra.mxu0 0.0
        %501 = vmatprep.subr.mxu0 0.0
        %502 = vmatpush2.xpose.msra.mxu0 0.0
        %503 = vmatprep.subr.mxu0 0.0
        %504 = vmatpush2.xpose.msra.mxu0 0.0
        %505 = vmatprep.mubr.f32.mxu0 0.0
        %506 = vmatmul.mubr.f32.gmra.mxu0 %v217
        %v507 = vpop.f32.mrf.mxu0
        %v508 = vadd.f32 0.0, %v507
        %v509 = vpop.f32.mrf.mxu0
        %510 = vdwg.mxu0
        %v511 = vlaneseq
        %v512 = vand.u32 %v511, 127
        %v513 = vld [vmem:[%s206] sm:$0x1]
        %v514 = vld [vmem:[%s206 + $0x1] sm:$0x1]
        %v515 = vld [vmem:[%s206 + $0x2] sm:$0x1]
        %v516 = vld [vmem:[%s206 + $0x3] sm:$0x1]
        %517 = vset.pattern.permute.xlu0 0
        %518 = vperm.xlu0 %517, %v513
        %v519 = vpop.permute.xlu0 %518
        %v520 = vlaneseq
        %v521 = vshrl.u32 %v520, 7
        %v522 = vsub.s32 0, %v521
        %v523 = vrot.slane %v519, %v522
        %524 = vset.pattern.permute.xlu0 0
        %525 = vperm.xlu0 %524, %v514
        %v526 = vpop.permute.xlu0 %525
        %v527 = vlaneseq
        %v528 = vshrl.u32 %v527, 7
        %v529 = vsub.s32 0, %v528
        %v530 = vrot.slane %v526, %v529
        %531 = vset.pattern.permute.xlu0 0
        %532 = vperm.xlu0 %531, %v515
        %v533 = vpop.permute.xlu0 %532
        %v534 = vlaneseq
        %v535 = vshrl.u32 %v534, 7
        %v536 = vsub.s32 0, %v535
        %v537 = vrot.slane %v533, %v536
        %538 = vset.pattern.permute.xlu0 0
        %539 = vperm.xlu0 %538, %v516
        %v540 = vpop.permute.xlu0 %539
        %v541 = vlaneseq
        %v542 = vshrl.u32 %v541, 7
        %v543 = vsub.s32 0, %v542
        %v544 = vrot.slane %v540, %v543
        %vm545 = vcmp.lt.s32.totalorder %v512, %v523
        %vm546 = vcmp.lt.s32.totalorder %v512, %v530
        %vm547 = vcmp.lt.s32.totalorder %v512, %v537
        %vm548 = vcmp.lt.s32.totalorder %v512, %v544
        %v549 = vsel %vm545, %v289, -inf
        %v550 = vsel %vm546, %v362, -inf
        %v551 = vsel %vm547, %v435, -inf
        %v552 = vsel %vm548, %v508, -inf
        %vm553 = vcmask 57344
        %v554 = vsel %vm553, %v549, -inf
        %555 = vmax.xlane.f32.xlu0 %v554
        %v556 = vpop.xlane.xlu0 %555
        %v557 = vsel %vm553, %v550, -inf
        %558 = vmax.xlane.f32.xlu0 %v557
        %v559 = vpop.xlane.xlu0 %558
        %v560 = vsel %vm553, %v551, -inf
        %561 = vmax.xlane.f32.xlu0 %v560
        %v562 = vpop.xlane.xlu0 %561
        %v563 = vsel %vm553, %v552, -inf
        %564 = vmax.xlane.f32.xlu0 %v563
        %v565 = vpop.xlane.xlu0 %564
        %v566 = vsub.f32 %v549, %v556
        %v567 = vsub.f32 %v550, %v559
        %v568 = vsub.f32 %v551, %v562
        %v569 = vsub.f32 %v552, %v565
        %v570 = vmul.f32 %v566, 1.442695
        %v571 = vpow.pop %v570
        %v572 = vmul.f32 %v567, 1.442695
        %v573 = vpow.pop %v572
        %v574 = vmul.f32 %v568, 1.442695
        %v575 = vpow.pop %v574
        %v576 = vmul.f32 %v569, 1.442695
        %v577 = vpow.pop %v576
        %v578 = vsel %vm553, %v571, 0.0
        %579 = vadd.xlane.f32.xlu0 %v578
        %v580 = vpop.xlane.xlu0 %579
        %v581 = vsel %vm553, %v573, 0.0
        %582 = vadd.xlane.f32.xlu0 %v581
        %v583 = vpop.xlane.xlu0 %582
        %v584 = vsel %vm553, %v575, 0.0
        %585 = vadd.xlane.f32.xlu0 %v584
        %v586 = vpop.xlane.xlu0 %585
        %v587 = vsel %vm553, %v577, 0.0
        %588 = vadd.xlane.f32.xlu0 %v587
        %v589 = vpop.xlane.xlu0 %588
        %v590 = vrcp.pop %v580
        %v591 = vrcp.pop %v583
        %v592 = vrcp.pop %v586
        %v593 = vrcp.pop %v589
        %v594 = vmul.f32 %v571, %v590
        %v595 = vmul.f32 %v573, %v591
        %v596 = vmul.f32 %v575, %v592
        %v597 = vmul.f32 %v577, %v593
        %vm598 = vcmask 64512
        %v600 = vsel %vm598, %v594, 0
        %602 = vmatprep.subr.mxu0 0.0
        %603 = vmatpush1.msra.mxu0 0.0
        %604 = vmatprep.subr.mxu0 0.0
        %605 = vmatpush1.msra.mxu0 0.0
        %606 = vmatprep.subr.mxu0 0.0
        %607 = vmatpush1.msra.mxu0 0.0
        %608 = vmatprep.subr.mxu0 0.0
        %609 = vmatpush1.msra.mxu0 0.0
        %610 = vmatprep.subr.mxu0 0.0
        %611 = vmatpush1.msra.mxu0 0.0
        %612 = vmatprep.subr.mxu0 0.0
        %613 = vmatpush1.msra.mxu0 0.0
        %614 = vmatprep.subr.mxu0 0.0
        %615 = vmatpush1.msra.mxu0 0.0
        %616 = vmatprep.subr.mxu0 0.0
        %617 = vmatpush1.msra.mxu0 0.0
        %618 = vmatprep.subr.mxu0 0.0
        %619 = vmatpush1.msra.mxu0 0.0
        %620 = vmatprep.subr.mxu0 0.0
        %621 = vmatpush1.msra.mxu0 0.0
        %622 = vmatprep.subr.mxu0 0.0
        %623 = vmatpush1.msra.mxu0 0.0
        %624 = vmatprep.subr.mxu0 0.0
        %625 = vmatpush1.msra.mxu0 0.0
        %626 = vmatprep.subr.mxu0 0.0
        %627 = vmatpush1.msra.mxu0 0.0
        %628 = vmatprep.subr.mxu0 0.0
        %629 = vmatpush1.msra.mxu0 0.0
        %630 = vmatprep.subr.mxu0 0.0
        %631 = vmatpush1.msra.mxu0 0.0
        %632 = vmatprep.subr.mxu0 0.0
        %633 = vmatpush1.msra.mxu0 %v210
        %634 = vmatprep.subr.mxu0 0.0
        %635 = vmatpush2.msra.mxu0 0.0
        %636 = vmatprep.subr.mxu0 0.0
        %637 = vmatpush2.msra.mxu0 0.0
        %638 = vmatprep.subr.mxu0 0.0
        %639 = vmatpush2.msra.mxu0 0.0
        %640 = vmatprep.subr.mxu0 0.0
        %641 = vmatpush2.msra.mxu0 0.0
        %642 = vmatprep.subr.mxu0 0.0
        %643 = vmatpush2.msra.mxu0 0.0
        %644 = vmatprep.subr.mxu0 0.0
        %645 = vmatpush2.msra.mxu0 0.0
        %646 = vmatprep.subr.mxu0 0.0
        %647 = vmatpush2.msra.mxu0 0.0
        %648 = vmatprep.subr.mxu0 0.0
        %649 = vmatpush2.msra.mxu0 0.0
        %650 = vmatprep.subr.mxu0 0.0
        %651 = vmatpush2.msra.mxu0 0.0
        %652 = vmatprep.subr.mxu0 0.0
        %653 = vmatpush2.msra.mxu0 0.0
        %654 = vmatprep.subr.mxu0 0.0
        %655 = vmatpush2.msra.mxu0 0.0
        %656 = vmatprep.subr.mxu0 0.0
        %657 = vmatpush2.msra.mxu0 0.0
        %658 = vmatprep.subr.mxu0 0.0
        %659 = vmatpush2.msra.mxu0 0.0
        %660 = vmatprep.subr.mxu0 0.0
        %661 = vmatpush2.msra.mxu0 0.0
        %662 = vmatprep.subr.mxu0 0.0
        %663 = vmatpush2.msra.mxu0 0.0
        %664 = vmatprep.subr.mxu0 0.0
        %665 = vmatpush2.msra.mxu0 0.0
        %666 = vmatprep.mubr.f32.mxu0 0.0
        %667 = vmatmul.mubr.f32.gmra.mxu0 %v600
        %v668 = vpop.f32.mrf.mxu0
        %v669 = vadd.f32 0.0, %v668
        %v670 = vpop.f32.mrf.mxu0
        %671 = vdwg.mxu0
        %v673 = vsel %vm598, %v595, 0
        %675 = vmatprep.subr.mxu0 0.0
        %676 = vmatpush1.msra.mxu0 0.0
        %677 = vmatprep.subr.mxu0 0.0
        %678 = vmatpush1.msra.mxu0 0.0
        %679 = vmatprep.subr.mxu0 0.0
        %680 = vmatpush1.msra.mxu0 0.0
        %681 = vmatprep.subr.mxu0 0.0
        %682 = vmatpush1.msra.mxu0 0.0
        %683 = vmatprep.subr.mxu0 0.0
        %684 = vmatpush1.msra.mxu0 0.0
        %685 = vmatprep.subr.mxu0 0.0
        %686 = vmatpush1.msra.mxu0 0.0
        %687 = vmatprep.subr.mxu0 0.0
        %688 = vmatpush1.msra.mxu0 0.0
        %689 = vmatprep.subr.mxu0 0.0
        %690 = vmatpush1.msra.mxu0 0.0
        %691 = vmatprep.subr.mxu0 0.0
        %692 = vmatpush1.msra.mxu0 0.0
        %693 = vmatprep.subr.mxu0 0.0
        %694 = vmatpush1.msra.mxu0 0.0
        %695 = vmatprep.subr.mxu0 0.0
        %696 = vmatpush1.msra.mxu0 0.0
        %697 = vmatprep.subr.mxu0 0.0
        %698 = vmatpush1.msra.mxu0 0.0
        %699 = vmatprep.subr.mxu0 0.0
        %700 = vmatpush1.msra.mxu0 0.0
        %701 = vmatprep.subr.mxu0 0.0
        %702 = vmatpush1.msra.mxu0 0.0
        %703 = vmatprep.subr.mxu0 0.0
        %704 = vmatpush1.msra.mxu0 0.0
        %705 = vmatprep.subr.mxu0 0.0
        %706 = vmatpush1.msra.mxu0 %v211
        %707 = vmatprep.subr.mxu0 0.0
        %708 = vmatpush2.msra.mxu0 0.0
        %709 = vmatprep.subr.mxu0 0.0
        %710 = vmatpush2.msra.mxu0 0.0
        %711 = vmatprep.subr.mxu0 0.0
        %712 = vmatpush2.msra.mxu0 0.0
        %713 = vmatprep.subr.mxu0 0.0
        %714 = vmatpush2.msra.mxu0 0.0
        %715 = vmatprep.subr.mxu0 0.0
        %716 = vmatpush2.msra.mxu0 0.0
        %717 = vmatprep.subr.mxu0 0.0
        %718 = vmatpush2.msra.mxu0 0.0
        %719 = vmatprep.subr.mxu0 0.0
        %720 = vmatpush2.msra.mxu0 0.0
        %721 = vmatprep.subr.mxu0 0.0
        %722 = vmatpush2.msra.mxu0 0.0
        %723 = vmatprep.subr.mxu0 0.0
        %724 = vmatpush2.msra.mxu0 0.0
        %725 = vmatprep.subr.mxu0 0.0
        %726 = vmatpush2.msra.mxu0 0.0
        %727 = vmatprep.subr.mxu0 0.0
        %728 = vmatpush2.msra.mxu0 0.0
        %729 = vmatprep.subr.mxu0 0.0
        %730 = vmatpush2.msra.mxu0 0.0
        %731 = vmatprep.subr.mxu0 0.0
        %732 = vmatpush2.msra.mxu0 0.0
        %733 = vmatprep.subr.mxu0 0.0
        %734 = vmatpush2.msra.mxu0 0.0
        %735 = vmatprep.subr.mxu0 0.0
        %736 = vmatpush2.msra.mxu0 0.0
        %737 = vmatprep.subr.mxu0 0.0
        %738 = vmatpush2.msra.mxu0 0.0
        %739 = vmatprep.mubr.f32.mxu0 0.0
        %740 = vmatmul.mubr.f32.gmra.mxu0 %v673
        %v741 = vpop.f32.mrf.mxu0
        %v742 = vadd.f32 0.0, %v741
        %v743 = vpop.f32.mrf.mxu0
        %744 = vdwg.mxu0
        %v746 = vsel %vm598, %v596, 0
        %748 = vmatprep.subr.mxu0 0.0
        %749 = vmatpush1.msra.mxu0 0.0
        %750 = vmatprep.subr.mxu0 0.0
        %751 = vmatpush1.msra.mxu0 0.0
        %752 = vmatprep.subr.mxu0 0.0
        %753 = vmatpush1.msra.mxu0 0.0
        %754 = vmatprep.subr.mxu0 0.0
        %755 = vmatpush1.msra.mxu0 0.0
        %756 = vmatprep.subr.mxu0 0.0
        %757 = vmatpush1.msra.mxu0 0.0
        %758 = vmatprep.subr.mxu0 0.0
        %759 = vmatpush1.msra.mxu0 0.0
        %760 = vmatprep.subr.mxu0 0.0
        %761 = vmatpush1.msra.mxu0 0.0
        %762 = vmatprep.subr.mxu0 0.0
        %763 = vmatpush1.msra.mxu0 0.0
        %764 = vmatprep.subr.mxu0 0.0
        %765 = vmatpush1.msra.mxu0 0.0
        %766 = vmatprep.subr.mxu0 0.0
        %767 = vmatpush1.msra.mxu0 0.0
        %768 = vmatprep.subr.mxu0 0.0
        %769 = vmatpush1.msra.mxu0 0.0
        %770 = vmatprep.subr.mxu0 0.0
        %771 = vmatpush1.msra.mxu0 0.0
        %772 = vmatprep.subr.mxu0 0.0
        %773 = vmatpush1.msra.mxu0 0.0
        %774 = vmatprep.subr.mxu0 0.0
        %775 = vmatpush1.msra.mxu0 0.0
        %776 = vmatprep.subr.mxu0 0.0
        %777 = vmatpush1.msra.mxu0 0.0
        %778 = vmatprep.subr.mxu0 0.0
        %779 = vmatpush1.msra.mxu0 %v212
        %780 = vmatprep.subr.mxu0 0.0
        %781 = vmatpush2.msra.mxu0 0.0
        %782 = vmatprep.subr.mxu0 0.0
        %783 = vmatpush2.msra.mxu0 0.0
        %784 = vmatprep.subr.mxu0 0.0
        %785 = vmatpush2.msra.mxu0 0.0
        %786 = vmatprep.subr.mxu0 0.0
        %787 = vmatpush2.msra.mxu0 0.0
        %788 = vmatprep.subr.mxu0 0.0
        %789 = vmatpush2.msra.mxu0 0.0
        %790 = vmatprep.subr.mxu0 0.0
        %791 = vmatpush2.msra.mxu0 0.0
        %792 = vmatprep.subr.mxu0 0.0
        %793 = vmatpush2.msra.mxu0 0.0
        %794 = vmatprep.subr.mxu0 0.0
        %795 = vmatpush2.msra.mxu0 0.0
        %796 = vmatprep.subr.mxu0 0.0
        %797 = vmatpush2.msra.mxu0 0.0
        %798 = vmatprep.subr.mxu0 0.0
        %799 = vmatpush2.msra.mxu0 0.0
        %800 = vmatprep.subr.mxu0 0.0
        %801 = vmatpush2.msra.mxu0 0.0
        %802 = vmatprep.subr.mxu0 0.0
        %803 = vmatpush2.msra.mxu0 0.0
        %804 = vmatprep.subr.mxu0 0.0
        %805 = vmatpush2.msra.mxu0 0.0
        %806 = vmatprep.subr.mxu0 0.0
        %807 = vmatpush2.msra.mxu0 0.0
        %808 = vmatprep.subr.mxu0 0.0
        %809 = vmatpush2.msra.mxu0 0.0
        %810 = vmatprep.subr.mxu0 0.0
        %811 = vmatpush2.msra.mxu0 0.0
        %812 = vmatprep.mubr.f32.mxu0 0.0
        %813 = vmatmul.mubr.f32.gmra.mxu0 %v746
        %v814 = vpop.f32.mrf.mxu0
        %v815 = vadd.f32 0.0, %v814
        %v816 = vpop.f32.mrf.mxu0
        %817 = vdwg.mxu0
        %v819 = vsel %vm598, %v597, 0
        %821 = vmatprep.subr.mxu0 0.0
        %822 = vmatpush1.msra.mxu0 0.0
        %823 = vmatprep.subr.mxu0 0.0
        %824 = vmatpush1.msra.mxu0 0.0
        %825 = vmatprep.subr.mxu0 0.0
        %826 = vmatpush1.msra.mxu0 0.0
        %827 = vmatprep.subr.mxu0 0.0
        %828 = vmatpush1.msra.mxu0 0.0
        %829 = vmatprep.subr.mxu0 0.0
        %830 = vmatpush1.msra.mxu0 0.0
        %831 = vmatprep.subr.mxu0 0.0
        %832 = vmatpush1.msra.mxu0 0.0
        %833 = vmatprep.subr.mxu0 0.0
        %834 = vmatpush1.msra.mxu0 0.0
        %835 = vmatprep.subr.mxu0 0.0
        %836 = vmatpush1.msra.mxu0 0.0
        %837 = vmatprep.subr.mxu0 0.0
        %838 = vmatpush1.msra.mxu0 0.0
        %839 = vmatprep.subr.mxu0 0.0
        %840 = vmatpush1.msra.mxu0 0.0
        %841 = vmatprep.subr.mxu0 0.0
        %842 = vmatpush1.msra.mxu0 0.0
        %843 = vmatprep.subr.mxu0 0.0
        %844 = vmatpush1.msra.mxu0 0.0
        %845 = vmatprep.subr.mxu0 0.0
        %846 = vmatpush1.msra.mxu0 0.0
        %847 = vmatprep.subr.mxu0 0.0
        %848 = vmatpush1.msra.mxu0 0.0
        %849 = vmatprep.subr.mxu0 0.0
        %850 = vmatpush1.msra.mxu0 0.0
        %851 = vmatprep.subr.mxu0 0.0
        %852 = vmatpush1.msra.mxu0 %v213
        %853 = vmatprep.subr.mxu0 0.0
        %854 = vmatpush2.msra.mxu0 0.0
        %855 = vmatprep.subr.mxu0 0.0
        %856 = vmatpush2.msra.mxu0 0.0
        %857 = vmatprep.subr.mxu0 0.0
        %858 = vmatpush2.msra.mxu0 0.0
        %859 = vmatprep.subr.mxu0 0.0
        %860 = vmatpush2.msra.mxu0 0.0
        %861 = vmatprep.subr.mxu0 0.0
        %862 = vmatpush2.msra.mxu0 0.0
        %863 = vmatprep.subr.mxu0 0.0
        %864 = vmatpush2.msra.mxu0 0.0
        %865 = vmatprep.subr.mxu0 0.0
        %866 = vmatpush2.msra.mxu0 0.0
        %867 = vmatprep.subr.mxu0 0.0
        %868 = vmatpush2.msra.mxu0 0.0
        %869 = vmatprep.subr.mxu0 0.0
        %870 = vmatpush2.msra.mxu0 0.0
        %871 = vmatprep.subr.mxu0 0.0
        %872 = vmatpush2.msra.mxu0 0.0
        %873 = vmatprep.subr.mxu0 0.0
        %874 = vmatpush2.msra.mxu0 0.0
        %875 = vmatprep.subr.mxu0 0.0
        %876 = vmatpush2.msra.mxu0 0.0
        %877 = vmatprep.subr.mxu0 0.0
        %878 = vmatpush2.msra.mxu0 0.0
        %879 = vmatprep.subr.mxu0 0.0
        %880 = vmatpush2.msra.mxu0 0.0
        %881 = vmatprep.subr.mxu0 0.0
        %882 = vmatpush2.msra.mxu0 0.0
        %883 = vmatprep.subr.mxu0 0.0
        %884 = vmatpush2.msra.mxu0 0.0
        %885 = vmatprep.mubr.f32.mxu0 0.0
        %886 = vmatmul.mubr.f32.gmra.mxu0 %v819
        %v887 = vpop.f32.mrf.mxu0
        %v888 = vadd.f32 0.0, %v887
        %v889 = vpop.f32.mrf.mxu0
        %890 = vdwg.mxu0
        %vm891 = vcmask 253952
        %892 = vst.msk [vmem:[%s202] sm:$0x1] %vm891, %v669
        %893 = vst.msk [vmem:[%s202 + $0x1] sm:$0x1] %vm891, %v742
        %894 = vst.msk [vmem:[%s202 + $0x2] sm:$0x1] %vm891, %v815
        %895 = vst.msk [vmem:[%s202 + $0x3] sm:$0x1] %vm891, %v888
        %s896 = sand.u32 %s101, 1
        %s897 = scalar_lea.sflag [#allocation4], %s896
        %s898 = sand.u32 %s101, 1
        %s899 = smul.addr %s898, 4
        %s900 = scalar_lea.vmem [#allocation5], %s899
        // Predicated region
        $region37: #{tpu_custom_call.1} parent=31 // pred_check
          %p901 = pneg %p111
        $region38: #{tpu_custom_call.1} parent=31 // pred_check_branch
          %903 = sbr.rel (%p901) target = $region40
        $region39: #{tpu_custom_call.1} parent=31 // pred_region
          %s904 = smul.u32 4, %s20
          %s906 = ssub.s32 64, 64
          %907 = vsyncadd %s897, %s906
          %s908 = smul.addr %s904, 16
          %s909 = scalar_lea.hbm %s3, %s908
          %s910 = sshll.u32 %s900, 4
          %s911 = int_to_ptr.vmem [resolvable:$true] %s910
          %916 = dma.vmem_to_hbm [thread:$0]  %s911, 64, %s909, %s897, 16, 16, 1
        $region40: #{tpu_custom_call.1} parent=31 // pred_fallthru
          _
      $region32: #{tpu_custom_call.1} parent=5 // pred_fallthru
        _
      %p917 = scmp.le.s32.totalorder 2, %s15
      // Predicated region
      $region41: #{tpu_custom_call.1} parent=5 // pred_check
        %p918 = pneg %p917
      $region42: #{tpu_custom_call.1} parent=5 // pred_check_branch
        %920 = sbr.rel (%p918) target = $region44
      $region43: #{tpu_custom_call.1} parent=5 // pred_region
        %s921 = ssub.s32 %s15, 2
        // Predicated region
        $region45: #{tpu_custom_call.1} parent=43 // pred_check
          %p922 = pneg %p117
        $region46: #{tpu_custom_call.1} parent=43 // pred_check_branch
          %924 = sbr.rel (%p922) target = $region48
        $region47: #{tpu_custom_call.1} parent=43 // pred_region
          %s925 = sand.u32 %s102, 1
          %s926 = scalar_lea.sflag [#allocation4], %s925
          %s927 = sand.u32 %s102, 1
          %s928 = smul.addr %s927, 4
          %s929 = scalar_lea.vmem [#allocation5], %s928
          %930 = dma.done %s926, 64
        $region48: #{tpu_custom_call.1} parent=43 // pred_fallthru
          _
      $region44: #{tpu_custom_call.1} parent=5 // pred_fallthru
        _
    $region6: #{tpu_custom_call.1} parent=1 // loop_footer
      %s19 = sadd.s32 1, %s15
    $region7: #{tpu_custom_call.1} parent=1 // loop_footer_branch
      %14 = sbr.rel target = $region3
    $region8: #{tpu_custom_call.1} parent=1 // loop_exit
      _
    %931 = vsyncpa [#allocation3], 1
    %s932 = scalar_lea.sflag [#allocation3], 1
    %933 = vsyncpa %s932, 1
    %934 = vsyncpa [#allocation4], 1
    %s935 = scalar_lea.sflag [#allocation4], 1
    %936 = vsyncpa %s935, 1

</llo_original>
